<compile_context>
chip_gen: v6e
topology: v6e:2x2x1
jax: 0.10.0
libtpu: 0.0.40
codegen_flags: <defaults>
</compile_context>

<pallas_src>
import jax
import jax.numpy as jnp
from jax.experimental import pallas as pl
from jax.experimental.pallas import tpu as pltpu

LN_EPS = 1e-5      # torch.nn.LayerNorm default
LANE = 128         # TPU lane width
HEAD_PAD = 8       # action-head lane padding (narrow output, masked store is fine)


def _round_up(x, m):
    return ((x + m - 1) // m) * m


def _cdiv(a, b):
    return (a + b - 1) // b


def _policy_kernel(scale, bias_c, ln_n1, ln_n2):
    """Kernel closure; action scale/bias and logical LN widths baked in at trace time."""
    inv_n1 = 1.0 / float(ln_n1)
    inv_n2 = 1.0 / float(ln_n2)

    def ln_relu(h, lnp, inv_n):
        # lnp rows: 0 = linear bias, 1 = gamma, 2 = beta (all zero in padded lanes).
        h = h + lnp[0:1, :]
        # One-pass LayerNorm over the *logical* width. Padded columns of h are exactly 0,
        # so the 128-lane sums only see the real features.
        s = jnp.sum(h, axis=-1, keepdims=True)
        ss = jnp.sum(h * h, axis=-1, keepdims=True)
        mu = s * inv_n
        var = ss * inv_n - mu * mu
        hn = (h - mu) * jax.lax.rsqrt(var + LN_EPS)
        # gamma/beta are zero in the padded columns -> padded lanes become exactly 0 again.
        return jnp.maximum(hn * lnp[1:2, :] + lnp[2:3, :], 0.0)

    def kernel(x_ref, w1_ref, lnp1_ref, w2_ref, lnp2_ref, w3_ref, b3_ref, o_ref):
        # In-kernel f32 -> bf16 cast (VPU, hidden under the input DMA).
        x = x_ref[...].astype(jnp.bfloat16)

        # hidden layer 1: Linear -> LayerNorm -> ReLU
        h = jnp.dot(x, w1_ref[...], preferred_element_type=jnp.float32)
        h = ln_relu(h, lnp1_ref[...], inv_n1)

        # hidden layer 2: Linear -> LayerNorm -> ReLU
        h = jnp.dot(h.astype(jnp.bfloat16), w2_ref[...],
                    preferred_element_type=jnp.float32)
        h = ln_relu(h, lnp2_ref[...], inv_n2)

        # output layer: Linear -> Tanh -> action rescale (narrow 8-lane store)
        z = jnp.dot(h.astype(jnp.bfloat16), w3_ref[...],
                    preferred_element_type=jnp.float32) + b3_ref[...]
        out = jnp.tanh(z) * scale
        if bias_c != 0.0:          # elided when a_min == -a_max
            out = out + bias_c
        o_ref[...] = out.astype(o_ref.dtype)

    return kernel


def init_params(key, dim_list):
    """Deterministic synthetic init (uniform, torch-Linear-like fan_in scaling), f32."""
    params = {}
    d0, d1, d2, d3 = dim_list
    for i, (din, dout) in enumerate([(d0, d1), (d1, d2), (d2, d3)], start=1):
        key, kw, kb = jax.random.split(key, 3)
        lim = 1.0 / jnp.sqrt(din)
        params[f"w{i}"] = jax.random.uniform(kw, (din, dout), jnp.float32, -lim, lim)
        params[f"b{i}"] = jax.random.uniform(kb, (1, dout), jnp.float32, -lim, lim)
    # LayerNorm affine params for the two hidden layers (gamma=1, beta=0)
    params["g1"] = jnp.ones((1, d1), jnp.float32)
    params["be1"] = jnp.zeros((1, d1), jnp.float32)
    params["g2"] = jnp.ones((1, d2), jnp.float32)
    params["be2"] = jnp.zeros((1, d2), jnp.float32)
    return params


def pad_params(params, dim_list):
    """Zero-pad hidden widths to 128 lanes, action head to 8 lanes (host-side, one time).

    Matmul weights -> bf16 (MXU-native, f32 accumulation in-kernel); biases / LN params
    stay f32 and are packed per layer into one (3, width) array (fewer DMA descriptors).
    """
    d0, d1, d2, d3 = dim_list
    p1, p2 = _round_up(d1, LANE), _round_up(d2, LANE)
    p3 = _round_up(d3, HEAD_PAD)

    def pad2(a, rows, cols):
        return jnp.pad(a, ((0, rows - a.shape[0]), (0, cols - a.shape[1])))

    lnp1 = jnp.concatenate([pad2(params["b1"], 1, p1),
                            pad2(params["g1"], 1, p1),      # padded gamma = 0
                            pad2(params["be1"], 1, p1)], axis=0)
    lnp2 = jnp.concatenate([pad2(params["b2"], 1, p2),
                            pad2(params["g2"], 1, p2),
                            pad2(params["be2"], 1, p2)], axis=0)
    return {
        "w1": pad2(params["w1"], d0, p1).astype(jnp.bfloat16),
        "lnp1": lnp1,                                        # (3, p1) f32
        "w2": pad2(params["w2"], p1, p2).astype(jnp.bfloat16),
        "lnp2": lnp2,                                        # (3, p2) f32
        "w3": pad2(params["w3"], p2, p3).astype(jnp.bfloat16),
        "b3": pad2(params["b3"], 1, p3),
    }


def gaussian_policy_forward(state, padded_params, dim_list, action_mag, *, block_b=1024):
    """state: (B, d0) f32.  padded_params: output of pad_params.  Returns (B, d3) f32."""
    d0, d1, d2, d3 = dim_list
    a_max, a_min = float(action_mag), -float(action_mag)
    scale = (a_max - a_min) / 2.0
    bias_c = (a_max + a_min) / 2.0

    B, din = state.shape
    assert din == d0

    p = padded_params
    P1, P2, P3 = p["w1"].shape[1], p["w2"].shape[1], p["w3"].shape[1]

    # Batch tile: big enough to sit near the HBM roofline / amortize ~0.35us per-step
    # overhead, but aim for >= ~4 grid steps so v7x's 2 TensorCores both get work.
    TB = min(block_b, max(16, _round_up(_cdiv(B, 4), 16)))
    if TB >= B:
        TB = B            # single full-batch block (equal-to-full-dim is layout-legal)
    grid_b = _cdiv(B, TB)  # ragged boundary block is fine: all math is row-independent

    args = (state, p["w1"], p["lnp1"], p["w2"], p["lnp2"], p["w3"], p["b3"])

    def param_spec(a):
        # Full-shape block, constant index_map -> parameter stays VMEM-resident.
        return pl.BlockSpec(a.shape, lambda i: (0, 0),
                            memory_space=pltpu.MemorySpace.VMEM)

    in_specs = [pl.BlockSpec((TB, d0), lambda i: (i, 0),
                             memory_space=pltpu.MemorySpace.VMEM)]
    in_specs += [param_spec(a) for a in args[1:]]

    param_bytes = sum(int(a.size) * a.dtype.itemsize for a in args[1:])
    vmem_need = (2 * TB * d0 * 4        # input block, double-buffered (f32)
                 + 2 * TB * P3 * 4      # output block, double-buffered (f32)
                 + 2 * param_bytes      # resident params (double-buffered by default)
                 + 8 * TB * LANE * 4)   # headroom for f32 (TB,128) intermediates
    vmem_limit = int(min(48 * 2**20, max(16 * 2**20, 2 * vmem_need)))

    flops = 2 * B * (d0 * P1 + P1 * P2 + P2 * P3)
    bytes_accessed = (int(state.size) * 4 + param_bytes + B * P3 * 4)

    out = pl.pallas_call(
        _policy_kernel(scale, bias_c, d1, d2),
        grid=(grid_b,),
        out_shape=jax.ShapeDtypeStruct((B, P3), jnp.float32),
        in_specs=in_specs,
        out_specs=pl.BlockSpec((TB, P3), lambda i: (i, 0),
                               memory_space=pltpu.MemorySpace.VMEM),
        compiler_params=pltpu.CompilerParams(
            dimension_semantics=("parallel",),   # shard batch grid over v7x's 2 TCs
            vmem_limit_bytes=vmem_limit),
        cost_estimate=pl.CostEstimate(
            flops=flops,
            transcendentals=B * (P3 + 2),        # tanh head + 2 rsqrt per row
            bytes_accessed=bytes_accessed),
    )(*args)

    # Strip the (tiny) lane padding of the action head.
    return out[:, :d3]


def reference_forward(state, params, action_mag):
    """Pure-JAX reference mirroring the kernel numerics (bf16 matmul inputs, f32 accum,
    one-pass LayerNorm). Same math as the PyTorch module's forward()."""
    scale = float(action_mag)

    def matmul(h, w, b):
        return jnp.dot(h.astype(jnp.bfloat16), w.astype(jnp.bfloat16),
                       preferred_element_type=jnp.float32) + b

    def ln_relu(h, g, be):
        n = h.shape[-1]
        mu = jnp.sum(h, -1, keepdims=True) * (1.0 / n)
        var = jnp.sum(h * h, -1, keepdims=True) * (1.0 / n) - mu * mu
        hn = (h - mu) * jax.lax.rsqrt(var + LN_EPS)
        return jnp.maximum(hn * g + be, 0.0)

    h = matmul(state, params["w1"], params["b1"])
    h = ln_relu(h, params["g1"], params["be1"])
    h = matmul(h, params["w2"], params["b2"])
    h = ln_relu(h, params["g2"], params["be2"])
    mean = jnp.tanh(matmul(h, params["w3"], params["b3"]))
    return mean * scale   # bias = 0 since a_min = -a_max


if __name__ == "__main__":
    # dimList = [state_dim, hidden, hidden, action_dim]
    dim_list = [16, 32, 32, 4]
    action_mag = 2.0
    batch = 8

    key = jax.random.PRNGKey(0)
    key, k_state = jax.random.split(key)
    state = jax.random.normal(k_state, (batch, dim_list[0]), jnp.float32)
    params = init_params(key, dim_list)
    padded = pad_params(params, dim_list)

    # Small-batch check (single grid step, block == full batch).
    out = gaussian_policy_forward(state, padded, dim_list, action_mag)
    out = jax.block_until_ready(out)
    ref = reference_forward(state, params, action_mag)
    assert out.shape == (batch, dim_list[-1])
    assert jnp.allclose(out, ref, atol=1e-3, rtol=1e-3), "mismatch vs reference (small batch)"

    # Multi-block batch-grid check: B=100 -> TB=32, 4 grid steps, ragged boundary block.
    key, k_big = jax.random.split(key)
    state_big = jax.random.normal(k_big, (100, dim_list[0]), jnp.float32)
    out_big = gaussian_policy_forward(state_big, padded, dim_list, action_mag)
    out_big = jax.block_until_ready(out_big)
    ref_big = reference_forward(state_big, params, action_mag)
    assert out_big.shape == (100, dim_list[-1])
    assert jnp.allclose(out_big, ref_big, atol=1e-3, rtol=1e-3), "mismatch vs reference (grid)"

    # TODO(synk): .sample()/.get_pdf() need the second log_std MLP + Normal rsample/log_prob;
    # only forward() is kernelized here.
    print("KERNEL_OK")
</pallas_src>

<mosaic_0001>
module attributes {stable_mosaic.version = 11 : i64} {
  func.func @kernel(%arg0: i32, %arg1: memref<8x16xf32, #tpu.memory_space<vmem>>, %arg2: memref<16x128xbf16, #tpu.memory_space<vmem>>, %arg3: memref<3x128xf32, #tpu.memory_space<vmem>>, %arg4: memref<128x128xbf16, #tpu.memory_space<vmem>>, %arg5: memref<3x128xf32, #tpu.memory_space<vmem>>, %arg6: memref<128x8xbf16, #tpu.memory_space<vmem>>, %arg7: memref<1x8xf32, #tpu.memory_space<vmem>>, %arg8: memref<8x8xf32, #tpu.memory_space<vmem>>) attributes {dimension_semantics = [#tpu.dimension_semantics<parallel>], iteration_bounds = array<i64: 1>, scalar_prefetch = 0 : i64, scratch_operands = 0 : i64, tpu.core_type = #tpu.core_type<tc>, window_params = [{transform_indices = @transform_0, window_bounds = array<i64: 8, 16>}, {pipeline_mode = #tpu.pipeline_mode<synchronous>, transform_indices = @transform_1, window_bounds = array<i64: 16, 128>}, {pipeline_mode = #tpu.pipeline_mode<synchronous>, transform_indices = @transform_2, window_bounds = array<i64: 3, 128>}, {pipeline_mode = #tpu.pipeline_mode<synchronous>, transform_indices = @transform_3, window_bounds = array<i64: 128, 128>}, {pipeline_mode = #tpu.pipeline_mode<synchronous>, transform_indices = @transform_4, window_bounds = array<i64: 3, 128>}, {pipeline_mode = #tpu.pipeline_mode<synchronous>, transform_indices = @transform_5, window_bounds = array<i64: 128, 8>}, {pipeline_mode = #tpu.pipeline_mode<synchronous>, transform_indices = @transform_6, window_bounds = array<i64: 1, 8>}, {transform_indices = @transform_7, window_bounds = array<i64: 8, 8>}]} {
    %c0 = arith.constant 0 : index
    %c0_0 = arith.constant 0 : index
    %0 = vector.load %arg1[%c0, %c0_0] : memref<8x16xf32, #tpu.memory_space<vmem>>, vector<8x16xf32>
    %1 = arith.truncf %0 : vector<8x16xf32> to vector<8x16xbf16>
    %c0_1 = arith.constant 0 : index
    %c0_2 = arith.constant 0 : index
    %2 = vector.load %arg2[%c0_1, %c0_2] : memref<16x128xbf16, #tpu.memory_space<vmem>>, vector<16x128xbf16>
    %cst = arith.constant dense<0.000000e+00> : vector<8x128xf32>
    %3 = tpu.matmul %1, %2, %cst {dimension_numbers = #tpu.dot_dimension_numbers<[1], [0], [0], [1], [0, 0, 1, 1], [], []>} : vector<8x16xbf16>, vector<16x128xbf16>, vector<8x128xf32> -> vector<8x128xf32>
    %c0_3 = arith.constant 0 : index
    %c0_4 = arith.constant 0 : index
    %4 = vector.load %arg3[%c0_3, %c0_4] : memref<3x128xf32, #tpu.memory_space<vmem>>, vector<3x128xf32>
    %5 = vector.extract_strided_slice %4 {offsets = [0, 0], sizes = [1, 128], strides = [1, 1]} : vector<3x128xf32> to vector<1x128xf32>
    %6 = vector.broadcast %5 : vector<1x128xf32> to vector<8x128xf32>
    %7 = arith.addf %3, %6 : vector<8x128xf32>
    %cst_5 = arith.constant dense<0.000000e+00> : vector<8xf32>
    %8 = vector.multi_reduction <add>, %7, %cst_5 [1] : vector<8x128xf32> to vector<8xf32>
    %9 = vector.shape_cast %8 : vector<8xf32> to vector<8x1xf32>
    %10 = arith.mulf %7, %7 : vector<8x128xf32>
    %cst_6 = arith.constant dense<0.000000e+00> : vector<8xf32>
    %11 = vector.multi_reduction <add>, %10, %cst_6 [1] : vector<8x128xf32> to vector<8xf32>
    %12 = vector.shape_cast %11 : vector<8xf32> to vector<8x1xf32>
    %cst_7 = arith.constant 3.125000e-02 : f32
    %13 = vector.broadcast %cst_7 : f32 to vector<8x1xf32>
    %14 = arith.mulf %9, %13 : vector<8x1xf32>
    %cst_8 = arith.constant 3.125000e-02 : f32
    %15 = vector.broadcast %cst_8 : f32 to vector<8x1xf32>
    %16 = arith.mulf %12, %15 : vector<8x1xf32>
    %17 = arith.mulf %14, %14 : vector<8x1xf32>
    %18 = arith.subf %16, %17 : vector<8x1xf32>
    %19 = vector.broadcast %14 : vector<8x1xf32> to vector<8x128xf32>
    %20 = arith.subf %7, %19 : vector<8x128xf32>
    %cst_9 = arith.constant 9.99999974E-6 : f32
    %21 = vector.broadcast %cst_9 : f32 to vector<8x1xf32>
    %22 = arith.addf %18, %21 : vector<8x1xf32>
    %23 = math.rsqrt %22 : vector<8x1xf32>
    %24 = vector.broadcast %23 : vector<8x1xf32> to vector<8x128xf32>
    %25 = arith.mulf %20, %24 : vector<8x128xf32>
    %26 = vector.extract_strided_slice %4 {offsets = [1, 0], sizes = [1, 128], strides = [1, 1]} : vector<3x128xf32> to vector<1x128xf32>
    %27 = vector.broadcast %26 : vector<1x128xf32> to vector<8x128xf32>
    %28 = arith.mulf %25, %27 : vector<8x128xf32>
    %29 = vector.extract_strided_slice %4 {offsets = [2, 0], sizes = [1, 128], strides = [1, 1]} : vector<3x128xf32> to vector<1x128xf32>
    %30 = vector.broadcast %29 : vector<1x128xf32> to vector<8x128xf32>
    %31 = arith.addf %28, %30 : vector<8x128xf32>
    %cst_10 = arith.constant 0.000000e+00 : f32
    %32 = vector.broadcast %cst_10 : f32 to vector<8x128xf32>
    %33 = arith.maximumf %31, %32 : vector<8x128xf32>
    %34 = arith.truncf %33 : vector<8x128xf32> to vector<8x128xbf16>
    %c0_11 = arith.constant 0 : index
    %c0_12 = arith.constant 0 : index
    %35 = vector.load %arg4[%c0_11, %c0_12] : memref<128x128xbf16, #tpu.memory_space<vmem>>, vector<128x128xbf16>
    %cst_13 = arith.constant dense<0.000000e+00> : vector<8x128xf32>
    %36 = tpu.matmul %34, %35, %cst_13 {dimension_numbers = #tpu.dot_dimension_numbers<[1], [0], [0], [1], [0, 0, 1, 1], [], []>} : vector<8x128xbf16>, vector<128x128xbf16>, vector<8x128xf32> -> vector<8x128xf32>
    %c0_14 = arith.constant 0 : index
    %c0_15 = arith.constant 0 : index
    %37 = vector.load %arg5[%c0_14, %c0_15] : memref<3x128xf32, #tpu.memory_space<vmem>>, vector<3x128xf32>
    %38 = vector.extract_strided_slice %37 {offsets = [0, 0], sizes = [1, 128], strides = [1, 1]} : vector<3x128xf32> to vector<1x128xf32>
    %39 = vector.broadcast %38 : vector<1x128xf32> to vector<8x128xf32>
    %40 = arith.addf %36, %39 : vector<8x128xf32>
    %cst_16 = arith.constant dense<0.000000e+00> : vector<8xf32>
    %41 = vector.multi_reduction <add>, %40, %cst_16 [1] : vector<8x128xf32> to vector<8xf32>
    %42 = vector.shape_cast %41 : vector<8xf32> to vector<8x1xf32>
    %43 = arith.mulf %40, %40 : vector<8x128xf32>
    %cst_17 = arith.constant dense<0.000000e+00> : vector<8xf32>
    %44 = vector.multi_reduction <add>, %43, %cst_17 [1] : vector<8x128xf32> to vector<8xf32>
    %45 = vector.shape_cast %44 : vector<8xf32> to vector<8x1xf32>
    %cst_18 = arith.constant 3.125000e-02 : f32
    %46 = vector.broadcast %cst_18 : f32 to vector<8x1xf32>
    %47 = arith.mulf %42, %46 : vector<8x1xf32>
    %cst_19 = arith.constant 3.125000e-02 : f32
    %48 = vector.broadcast %cst_19 : f32 to vector<8x1xf32>
    %49 = arith.mulf %45, %48 : vector<8x1xf32>
    %50 = arith.mulf %47, %47 : vector<8x1xf32>
    %51 = arith.subf %49, %50 : vector<8x1xf32>
    %52 = vector.broadcast %47 : vector<8x1xf32> to vector<8x128xf32>
    %53 = arith.subf %40, %52 : vector<8x128xf32>
    %cst_20 = arith.constant 9.99999974E-6 : f32
    %54 = vector.broadcast %cst_20 : f32 to vector<8x1xf32>
    %55 = arith.addf %51, %54 : vector<8x1xf32>
    %56 = math.rsqrt %55 : vector<8x1xf32>
    %57 = vector.broadcast %56 : vector<8x1xf32> to vector<8x128xf32>
    %58 = arith.mulf %53, %57 : vector<8x128xf32>
    %59 = vector.extract_strided_slice %37 {offsets = [1, 0], sizes = [1, 128], strides = [1, 1]} : vector<3x128xf32> to vector<1x128xf32>
    %60 = vector.broadcast %59 : vector<1x128xf32> to vector<8x128xf32>
    %61 = arith.mulf %58, %60 : vector<8x128xf32>
    %62 = vector.extract_strided_slice %37 {offsets = [2, 0], sizes = [1, 128], strides = [1, 1]} : vector<3x128xf32> to vector<1x128xf32>
    %63 = vector.broadcast %62 : vector<1x128xf32> to vector<8x128xf32>
    %64 = arith.addf %61, %63 : vector<8x128xf32>
    %cst_21 = arith.constant 0.000000e+00 : f32
    %65 = vector.broadcast %cst_21 : f32 to vector<8x128xf32>
    %66 = arith.maximumf %64, %65 : vector<8x128xf32>
    %67 = arith.truncf %66 : vector<8x128xf32> to vector<8x128xbf16>
    %c0_22 = arith.constant 0 : index
    %c0_23 = arith.constant 0 : index
    %68 = vector.load %arg6[%c0_22, %c0_23] : memref<128x8xbf16, #tpu.memory_space<vmem>>, vector<128x8xbf16>
    %cst_24 = arith.constant dense<0.000000e+00> : vector<8x8xf32>
    %69 = tpu.matmul %67, %68, %cst_24 {dimension_numbers = #tpu.dot_dimension_numbers<[1], [0], [0], [1], [0, 0, 1, 1], [], []>} : vector<8x128xbf16>, vector<128x8xbf16>, vector<8x8xf32> -> vector<8x8xf32>
    %c0_25 = arith.constant 0 : index
    %c0_26 = arith.constant 0 : index
    %70 = vector.load %arg7[%c0_25, %c0_26] : memref<1x8xf32, #tpu.memory_space<vmem>>, vector<1x8xf32>
    %71 = vector.broadcast %70 : vector<1x8xf32> to vector<8x8xf32>
    %72 = arith.addf %69, %71 : vector<8x8xf32>
    %73 = math.tanh %72 : vector<8x8xf32>
    %cst_27 = arith.constant 2.000000e+00 : f32
    %74 = vector.broadcast %cst_27 : f32 to vector<8x8xf32>
    %75 = arith.mulf %73, %74 : vector<8x8xf32>
    %c0_28 = arith.constant 0 : index
    %c0_29 = arith.constant 0 : index
    %76 = vector.load %arg8[%c0_28, %c0_29] : memref<8x8xf32, #tpu.memory_space<vmem>>, vector<8x8xf32>
    tpu.vector_store %arg8[%c0_28, %c0_29], %75 {strides = array<i32>} : memref<8x8xf32, #tpu.memory_space<vmem>>, vector<8x8xf32>,
    return
  }
  func.func @transform_0(%arg0: i32) -> (i32, i32) {
    %c0_i32 = arith.constant 0 : i32
    %c0_i32_0 = arith.constant 0 : i32
    return %arg0, %c0_i32 : i32, i32
  }
  func.func @transform_1(%arg0: i32) -> (i32, i32) {
    %c0_i32 = arith.constant 0 : i32
    %c0_i32_0 = arith.constant 0 : i32
    %c0_i32_1 = arith.constant 0 : i32
    return %c0_i32, %c0_i32_0 : i32, i32
  }
  func.func @transform_2(%arg0: i32) -> (i32, i32) {
    %c0_i32 = arith.constant 0 : i32
    %c0_i32_0 = arith.constant 0 : i32
    %c0_i32_1 = arith.constant 0 : i32
    return %c0_i32, %c0_i32_0 : i32, i32
  }
  func.func @transform_3(%arg0: i32) -> (i32, i32) {
    %c0_i32 = arith.constant 0 : i32
    %c0_i32_0 = arith.constant 0 : i32
    %c0_i32_1 = arith.constant 0 : i32
    return %c0_i32, %c0_i32_0 : i32, i32
  }
  func.func @transform_4(%arg0: i32) -> (i32, i32) {
    %c0_i32 = arith.constant 0 : i32
    %c0_i32_0 = arith.constant 0 : i32
    %c0_i32_1 = arith.constant 0 : i32
    return %c0_i32, %c0_i32_0 : i32, i32
  }
  func.func @transform_5(%arg0: i32) -> (i32, i32) {
    %c0_i32 = arith.constant 0 : i32
    %c0_i32_0 = arith.constant 0 : i32
    %c0_i32_1 = arith.constant 0 : i32
    return %c0_i32, %c0_i32_0 : i32, i32
  }
  func.func @transform_6(%arg0: i32) -> (i32, i32) {
    %c0_i32 = arith.constant 0 : i32
    %c0_i32_0 = arith.constant 0 : i32
    %c0_i32_1 = arith.constant 0 : i32
    return %c0_i32, %c0_i32_0 : i32, i32
  }
  func.func @transform_7(%arg0: i32) -> (i32, i32) {
    %c0_i32 = arith.constant 0 : i32
    %c0_i32_0 = arith.constant 0 : i32
    return %arg0, %c0_i32 : i32, i32
  }
}

</mosaic_0001>

<llo_original>
// kernel: tpu_custom_call.1
$region0: #{tpu_custom_call.1}
  #allocation0 [shape = 'u32[]', space=smem, size = 0x4, offset = 0x4, fixed_abs, tag = 'smem constant byte address 0x4 - core index']
  #allocation1 [shape = 'u32[144,128]{1,0:T(1,128)}', space=vmem, size = 0x12000, scoped, tag = 'internal scratch']
  %s0 = inlined_call_operand.vmem [shape: f32[8,16], index: 0, kind: input, shape index: {}]
  %s1 = inlined_call_operand.hbm [shape: bf16[16,128], index: 1, kind: input, shape index: {}]
  %s2 = inlined_call_operand.hbm [shape: f32[3,128], index: 2, kind: input, shape index: {}]
  %s3 = inlined_call_operand.vmem [shape: bf16[128,128], index: 3, kind: input, shape index: {}]
  %s4 = inlined_call_operand.hbm [shape: f32[3,128], index: 4, kind: input, shape index: {}]
  %s5 = inlined_call_operand.vmem [shape: bf16[128,8], index: 5, kind: input, shape index: {}]
  %s6 = inlined_call_operand.vmem [shape: f32[1,8], index: 6, kind: input, shape index: {}]
  %s7 = inlined_call_operand.hbm [shape: f32[8,8], index: 7, kind: output, shape index: {}]
  %s8 = sld [smem:[#allocation0]]
  $region50: #{tpu_custom_call.1} parent=0
    _
  %s10 = ssub.s32 1, %s8
  %s11 = scalar_select 0, %s10, %s8
  $region1: #{tpu_custom_call.1} parent=0
    #allocation2 [shape = 'u8[4096]{0}', space=vmem, size = 0x1000, scoped, tag = 'input window, operand 1, single buffered']
    #allocation3 [shape = 's32[1]{0}', space=sflag, size = 0x4, scoped, tag = 'scoped memory for tpu_custom_call.1']
    #allocation4 [shape = 's32[1]{0}', space=sflag, size = 0x4, scoped, tag = 'scoped memory for tpu_custom_call.1']
    #allocation5 [shape = 'u8[2048]{0}', space=vmem, size = 0x800, scoped, tag = 'input window, operand 2, single buffered']
    #allocation6 [shape = 's32[1]{0}', space=sflag, size = 0x4, scoped, tag = 'scoped memory for tpu_custom_call.1']
    #allocation7 [shape = 'u8[2048]{0}', space=vmem, size = 0x800, scoped, tag = 'input window, operand 4, single buffered']
    #allocation8 [shape = 'u8[4096]{0}', space=vmem, size = 0x1000, scoped, tag = 'output window, operand 0, single buffered']
    %12 = vsyncpa [#allocation3], 0
    %13 = vsyncpa [#allocation6], 0
    %14 = vsyncpa [#allocation4], 0
    // Predicated region
    $region2: #{tpu_custom_call.1} parent=1 // pred_check
      _
    $region3: #{tpu_custom_call.1} parent=1 // pred_check_branch
      %16 = sbr.rel (0) target = $region5
    $region4: #{tpu_custom_call.1} parent=1 // pred_region
      _
    $region5: #{tpu_custom_call.1} parent=1 // pred_fallthru
      _
    // Predicated region
    $region6: #{tpu_custom_call.1} parent=1 // pred_check
      _
    $region7: #{tpu_custom_call.1} parent=1 // pred_check_branch
      %18 = sbr.rel (0) target = $region9
    $region8: #{tpu_custom_call.1} parent=1 // pred_region
      %s20 = ssub.s32 128, 128
      %21 = vsyncadd [#allocation3], %s20
      %s22 = sshll.u32 [#allocation2], 4
      %s23 = int_to_ptr.vmem [resolvable:$true] %s22
      %28 = dma.hbm_to_vmem [thread:$0]  %s1, 128, %s23, [#allocation3], 64, 64, 4
    $region9: #{tpu_custom_call.1} parent=1 // pred_fallthru
      _
    // Predicated region
    $region10: #{tpu_custom_call.1} parent=1 // pred_check
      _
    $region11: #{tpu_custom_call.1} parent=1 // pred_check_branch
      %30 = sbr.rel (0) target = $region13
    $region12: #{tpu_custom_call.1} parent=1 // pred_region
      %s32 = ssub.s32 64, 64
      %33 = vsyncadd [#allocation6], %s32
      %s35 = sshll.u32 [#allocation5], 4
      %s36 = int_to_ptr.vmem [resolvable:$true] %s35
      %38 = dma.hbm_to_vmem [thread:$0]  %s2, 64, %s36, [#allocation6]
    $region13: #{tpu_custom_call.1} parent=1 // pred_fallthru
      _
    // Predicated region
    $region14: #{tpu_custom_call.1} parent=1 // pred_check
      _
    $region15: #{tpu_custom_call.1} parent=1 // pred_check_branch
      %40 = sbr.rel (0) target = $region17
    $region16: #{tpu_custom_call.1} parent=1 // pred_region
      _
    $region17: #{tpu_custom_call.1} parent=1 // pred_fallthru
      _
    // Predicated region
    $region18: #{tpu_custom_call.1} parent=1 // pred_check
      _
    $region19: #{tpu_custom_call.1} parent=1 // pred_check_branch
      %42 = sbr.rel (0) target = $region21
    $region20: #{tpu_custom_call.1} parent=1 // pred_region
      %s44 = ssub.s32 64, 64
      %45 = vsyncadd [#allocation6], %s44
      %s47 = sshll.u32 [#allocation7], 4
      %s48 = int_to_ptr.vmem [resolvable:$true] %s47
      %50 = dma.hbm_to_vmem [thread:$0]  %s4, 64, %s48, [#allocation6]
    $region21: #{tpu_custom_call.1} parent=1 // pred_fallthru
      _
    // Predicated region
    $region22: #{tpu_custom_call.1} parent=1 // pred_check
      _
    $region23: #{tpu_custom_call.1} parent=1 // pred_check_branch
      %52 = sbr.rel (0) target = $region25
    $region24: #{tpu_custom_call.1} parent=1 // pred_region
      _
    $region25: #{tpu_custom_call.1} parent=1 // pred_fallthru
      _
    // Predicated region
    $region26: #{tpu_custom_call.1} parent=1 // pred_check
      _
    $region27: #{tpu_custom_call.1} parent=1 // pred_check_branch
      %54 = sbr.rel (0) target = $region29
    $region28: #{tpu_custom_call.1} parent=1 // pred_region
      _
    $region29: #{tpu_custom_call.1} parent=1 // pred_fallthru
      _
    // Predicated region
    $region30: #{tpu_custom_call.1} parent=1 // pred_check
      _
    $region31: #{tpu_custom_call.1} parent=1 // pred_check_branch
      %56 = sbr.rel (0) target = $region33
    $region32: #{tpu_custom_call.1} parent=1 // pred_region
      %57 = dma.done [#allocation3], 128
    $region33: #{tpu_custom_call.1} parent=1 // pred_fallthru
      _
    // Predicated region
    $region34: #{tpu_custom_call.1} parent=1 // pred_check
      _
    $region35: #{tpu_custom_call.1} parent=1 // pred_check_branch
      %59 = sbr.rel (0) target = $region37
    $region36: #{tpu_custom_call.1} parent=1 // pred_region
      %60 = dma.done [#allocation6], 64
    $region37: #{tpu_custom_call.1} parent=1 // pred_fallthru
      _
    // Predicated region
    $region38: #{tpu_custom_call.1} parent=1 // pred_check
      _
    $region39: #{tpu_custom_call.1} parent=1 // pred_check_branch
      %62 = sbr.rel (0) target = $region41
    $region40: #{tpu_custom_call.1} parent=1 // pred_region
      %63 = dma.done [#allocation6], 64
    $region41: #{tpu_custom_call.1} parent=1 // pred_fallthru
      _
    %v65 = vld [vmem:[%s0] sm:$0xff]
    %v66 = vpack.c.bf16 %v65, %v65
    %v67 = vld [vmem:[#allocation2] sm:$0xf]
    %v68 = vld [vmem:[#allocation2 + $0x4] sm:$0xf]
    %v69 = vld [vmem:[#allocation5] sm:$0x7]
    %v70 = vlaneseq
    %v71 = vshrl.u32 %v70, 7
    %v72 = vsub.s32 0, %v71
    %v73 = vrot.slane %v69, %v72
    %v76 = vunpack.c.l.b16 %v67
    %v77 = vunpack.c.l.b16 %v68
    %v78 = vpack.c.b16 %v77, %v76
    %vm80 = vcmask 130048
    %v82 = vsel %vm80, %v66, 0
    %84 = vmatprep.subr.bf16.mxu0 0
    %85 = vmatpush1.bf16.msra.mxu0 0
    %86 = vmatprep.subr.bf16.mxu0 0
    %87 = vmatpush1.bf16.msra.mxu0 0
    %88 = vmatprep.subr.bf16.mxu0 0
    %89 = vmatpush1.bf16.msra.mxu0 0
    %90 = vmatprep.subr.bf16.mxu0 0
    %91 = vmatpush1.bf16.msra.mxu0 0
    %92 = vmatprep.subr.bf16.mxu0 0
    %93 = vmatpush1.bf16.msra.mxu0 0
    %94 = vmatprep.subr.bf16.mxu0 0
    %95 = vmatpush1.bf16.msra.mxu0 0
    %96 = vmatprep.subr.bf16.mxu0 0
    %97 = vmatpush1.bf16.msra.mxu0 0
    %98 = vmatprep.subr.bf16.mxu0 0
    %99 = vmatpush1.bf16.msra.mxu0 %v78
    %100 = vmatprep.subr.bf16.mxu0 0
    %101 = vmatpush2.bf16.msra.mxu0 0
    %102 = vmatprep.subr.bf16.mxu0 0
    %103 = vmatpush2.bf16.msra.mxu0 0
    %104 = vmatprep.subr.bf16.mxu0 0
    %105 = vmatpush2.bf16.msra.mxu0 0
    %106 = vmatprep.subr.bf16.mxu0 0
    %107 = vmatpush2.bf16.msra.mxu0 0
    %108 = vmatprep.subr.bf16.mxu0 0
    %109 = vmatpush2.bf16.msra.mxu0 0
    %110 = vmatprep.subr.bf16.mxu0 0
    %111 = vmatpush2.bf16.msra.mxu0 0
    %112 = vmatprep.subr.bf16.mxu0 0
    %113 = vmatpush2.bf16.msra.mxu0 0
    %114 = vmatprep.subr.bf16.mxu0 0
    %115 = vmatpush2.bf16.msra.mxu0 0
    %116 = vmatprep.mubr.bf16.mxu0 0
    %117 = vmatmul.mubr.bf16.gmra.mxu0 %v82
    %v118 = vpop.f32.mrf.mxu0
    %v119 = vadd.f32 %v73, %v118
    %v120 = vpop.f32.mrf.mxu0
    %v121 = vpop.f32.mrf.mxu0
    %v122 = vpop.f32.mrf.mxu0
    %123 = vdwg.mxu0
    %124 = vadd.xlane.f32.xlu0 %v119
    %v125 = vpop.xlane.xlu0 %124
    %v126 = vmul.f32 %v119, %v119
    %127 = vadd.xlane.f32.xlu0 %v126
    %v128 = vpop.xlane.xlu0 %127
    %v129 = vmul.f32 %v125, 0.03125
    %v130 = vmul.f32 %v128, 0.03125
    %v131 = vmul.f32 %v129, %v129
    %v132 = vsub.f32 %v130, %v131
    %v133 = vsub.f32 %v119, %v129
    %v134 = vadd.f32 %v132, 1e-05
    %v135 = vrsqrt.pop %v134
    %v136 = vmul.f32 %v133, %v135
    %v137 = vlaneseq
    %v138 = vshrl.u32 %v137, 7
    %v139 = vsub.s32 1, %v138
    %v140 = vrot.slane %v69, %v139
    %v141 = vmul.f32 %v136, %v140
    %v142 = vlaneseq
    %v143 = vshrl.u32 %v142, 7
    %v144 = vsub.s32 2, %v143
    %v145 = vrot.slane %v69, %v144
    %v146 = vadd.f32 %v141, %v145
    %v147 = vmax.f32 %v146, 0.0
    %v148 = vpack.c.bf16 %v147, %v147
    %v149 = vld [vmem:[%s3] sm:$0xf]
    %v150 = vld [vmem:[%s3 + $0x4] sm:$0xf]
    %v151 = vld [vmem:[%s3 + $0x8] sm:$0xf]
    %v152 = vld [vmem:[%s3 + $0xc] sm:$0xf]
    %v153 = vld [vmem:[%s3 + $0x10] sm:$0xf]
    %v154 = vld [vmem:[%s3 + $0x14] sm:$0xf]
    %v155 = vld [vmem:[%s3 + $0x18] sm:$0xf]
    %v156 = vld [vmem:[%s3 + $0x1c] sm:$0xf]
    %v157 = vld [vmem:[%s3 + $0x20] sm:$0xf]
    %v158 = vld [vmem:[%s3 + $0x24] sm:$0xf]
    %v159 = vld [vmem:[%s3 + $0x28] sm:$0xf]
    %v160 = vld [vmem:[%s3 + $0x2c] sm:$0xf]
    %v161 = vld [vmem:[%s3 + $0x30] sm:$0xf]
    %v162 = vld [vmem:[%s3 + $0x34] sm:$0xf]
    %v163 = vld [vmem:[%s3 + $0x38] sm:$0xf]
    %v164 = vld [vmem:[%s3 + $0x3c] sm:$0xf]
    %v165 = vld [vmem:[#allocation7] sm:$0x7]
    %v166 = vlaneseq
    %v167 = vshrl.u32 %v166, 7
    %v168 = vsub.s32 0, %v167
    %v169 = vrot.slane %v165, %v168
    %v186 = vunpack.c.l.b16 %v149
    %v187 = vunpack.c.l.b16 %v150
    %v188 = vunpack.c.l.b16 %v151
    %v189 = vunpack.c.l.b16 %v152
    %v190 = vunpack.c.l.b16 %v153
    %v191 = vunpack.c.l.b16 %v154
    %v192 = vunpack.c.l.b16 %v155
    %v193 = vunpack.c.l.b16 %v156
    %v194 = vunpack.c.l.b16 %v157
    %v195 = vunpack.c.l.b16 %v158
    %v196 = vunpack.c.l.b16 %v159
    %v197 = vunpack.c.l.b16 %v160
    %v198 = vunpack.c.l.b16 %v161
    %v199 = vunpack.c.l.b16 %v162
    %v200 = vunpack.c.l.b16 %v163
    %v201 = vunpack.c.l.b16 %v164
    %v202 = vpack.c.b16 %v187, %v186
    %v203 = vpack.c.b16 %v189, %v188
    %v204 = vpack.c.b16 %v191, %v190
    %v205 = vpack.c.b16 %v193, %v192
    %v206 = vpack.c.b16 %v195, %v194
    %v207 = vpack.c.b16 %v197, %v196
    %v208 = vpack.c.b16 %v199, %v198
    %v209 = vpack.c.b16 %v201, %v200
    %218 = vmatprep.subr.bf16.mxu0 0
    %219 = vmatpush1.bf16.msra.mxu0 %v209
    %220 = vmatprep.subr.bf16.mxu0 0
    %221 = vmatpush1.bf16.msra.mxu0 %v208
    %222 = vmatprep.subr.bf16.mxu0 0
    %223 = vmatpush1.bf16.msra.mxu0 %v207
    %224 = vmatprep.subr.bf16.mxu0 0
    %225 = vmatpush1.bf16.msra.mxu0 %v206
    %226 = vmatprep.subr.bf16.mxu0 0
    %227 = vmatpush1.bf16.msra.mxu0 %v205
    %228 = vmatprep.subr.bf16.mxu0 0
    %229 = vmatpush1.bf16.msra.mxu0 %v204
    %230 = vmatprep.subr.bf16.mxu0 0
    %231 = vmatpush1.bf16.msra.mxu0 %v203
    %232 = vmatprep.subr.bf16.mxu0 0
    %233 = vmatpush1.bf16.msra.mxu0 %v202
    %234 = vmatprep.subr.bf16.mxu0 0
    %235 = vmatpush2.bf16.msra.mxu0 0
    %236 = vmatprep.subr.bf16.mxu0 0
    %237 = vmatpush2.bf16.msra.mxu0 0
    %238 = vmatprep.subr.bf16.mxu0 0
    %239 = vmatpush2.bf16.msra.mxu0 0
    %240 = vmatprep.subr.bf16.mxu0 0
    %241 = vmatpush2.bf16.msra.mxu0 0
    %242 = vmatprep.subr.bf16.mxu0 0
    %243 = vmatpush2.bf16.msra.mxu0 0
    %244 = vmatprep.subr.bf16.mxu0 0
    %245 = vmatpush2.bf16.msra.mxu0 0
    %246 = vmatprep.subr.bf16.mxu0 0
    %247 = vmatpush2.bf16.msra.mxu0 0
    %248 = vmatprep.subr.bf16.mxu0 0
    %249 = vmatpush2.bf16.msra.mxu0 0
    %250 = vmatprep.mubr.bf16.mxu0 0
    %251 = vmatmul.mubr.bf16.gmra.mxu0 %v148
    %v252 = vpop.f32.mrf.mxu0
    %v253 = vadd.f32 %v169, %v252
    %v254 = vpop.f32.mrf.mxu0
    %v255 = vpop.f32.mrf.mxu0
    %v256 = vpop.f32.mrf.mxu0
    %257 = vdwg.mxu0
    %258 = vadd.xlane.f32.xlu0 %v253
    %v259 = vpop.xlane.xlu0 %258
    %v260 = vmul.f32 %v253, %v253
    %261 = vadd.xlane.f32.xlu0 %v260
    %v262 = vpop.xlane.xlu0 %261
    %v263 = vmul.f32 %v259, 0.03125
    %v264 = vmul.f32 %v262, 0.03125
    %v265 = vmul.f32 %v263, %v263
    %v266 = vsub.f32 %v264, %v265
    %v267 = vsub.f32 %v253, %v263
    %v268 = vadd.f32 %v266, 1e-05
    %v269 = vrsqrt.pop %v268
    %v270 = vmul.f32 %v267, %v269
    %v271 = vlaneseq
    %v272 = vshrl.u32 %v271, 7
    %v273 = vsub.s32 1, %v272
    %v274 = vrot.slane %v165, %v273
    %v275 = vmul.f32 %v270, %v274
    %v276 = vlaneseq
    %v277 = vshrl.u32 %v276, 7
    %v278 = vsub.s32 2, %v277
    %v279 = vrot.slane %v165, %v278
    %v280 = vadd.f32 %v275, %v279
    %v281 = vmax.f32 %v280, 0.0
    %v282 = vpack.c.bf16 %v281, %v281
    %v283 = vld [vmem:[%s5] sm:$0xf]
    %v284 = vld [vmem:[%s5 + $0x4] sm:$0xf]
    %v285 = vld [vmem:[%s5 + $0x8] sm:$0xf]
    %v286 = vld [vmem:[%s5 + $0xc] sm:$0xf]
    %v287 = vld [vmem:[%s5 + $0x10] sm:$0xf]
    %v288 = vld [vmem:[%s5 + $0x14] sm:$0xf]
    %v289 = vld [vmem:[%s5 + $0x18] sm:$0xf]
    %v290 = vld [vmem:[%s5 + $0x1c] sm:$0xf]
    %v291 = vld [vmem:[%s5 + $0x20] sm:$0xf]
    %v292 = vld [vmem:[%s5 + $0x24] sm:$0xf]
    %v293 = vld [vmem:[%s5 + $0x28] sm:$0xf]
    %v294 = vld [vmem:[%s5 + $0x2c] sm:$0xf]
    %v295 = vld [vmem:[%s5 + $0x30] sm:$0xf]
    %v296 = vld [vmem:[%s5 + $0x34] sm:$0xf]
    %v297 = vld [vmem:[%s5 + $0x38] sm:$0xf]
    %v298 = vld [vmem:[%s5 + $0x3c] sm:$0xf]
    %v299 = vld [vmem:[%s6] sm:$0x1]
    %v301 = vlaneseq
    %v302 = vshrl.u32 %v301, 7
    %v303 = vsub.s32 0, %v302
    %v304 = vrot.slane %v299, %v303
    %v322 = vunpack.c.l.b16 %v283
    %v323 = vunpack.c.l.b16 %v284
    %v324 = vunpack.c.l.b16 %v285
    %v325 = vunpack.c.l.b16 %v286
    %v326 = vunpack.c.l.b16 %v287
    %v327 = vunpack.c.l.b16 %v288
    %v328 = vunpack.c.l.b16 %v289
    %v329 = vunpack.c.l.b16 %v290
    %v330 = vunpack.c.l.b16 %v291
    %v331 = vunpack.c.l.b16 %v292
    %v332 = vunpack.c.l.b16 %v293
    %v333 = vunpack.c.l.b16 %v294
    %v334 = vunpack.c.l.b16 %v295
    %v335 = vunpack.c.l.b16 %v296
    %v336 = vunpack.c.l.b16 %v297
    %v337 = vunpack.c.l.b16 %v298
    %v338 = vpack.c.b16 %v323, %v322
    %v339 = vpack.c.b16 %v325, %v324
    %v340 = vpack.c.b16 %v327, %v326
    %v341 = vpack.c.b16 %v329, %v328
    %v342 = vpack.c.b16 %v331, %v330
    %v343 = vpack.c.b16 %v333, %v332
    %v344 = vpack.c.b16 %v335, %v334
    %v345 = vpack.c.b16 %v337, %v336
    %354 = vmatprep.subr.bf16.mxu0 0
    %355 = vmatpush1.bf16.msra.mxu0 %v345
    %356 = vmatprep.subr.bf16.mxu0 0
    %357 = vmatpush1.bf16.msra.mxu0 %v344
    %358 = vmatprep.subr.bf16.mxu0 0
    %359 = vmatpush1.bf16.msra.mxu0 %v343
    %360 = vmatprep.subr.bf16.mxu0 0
    %361 = vmatpush1.bf16.msra.mxu0 %v342
    %362 = vmatprep.subr.bf16.mxu0 0
    %363 = vmatpush1.bf16.msra.mxu0 %v341
    %364 = vmatprep.subr.bf16.mxu0 0
    %365 = vmatpush1.bf16.msra.mxu0 %v340
    %366 = vmatprep.subr.bf16.mxu0 0
    %367 = vmatpush1.bf16.msra.mxu0 %v339
    %368 = vmatprep.subr.bf16.mxu0 0
    %369 = vmatpush1.bf16.msra.mxu0 %v338
    %370 = vmatprep.subr.bf16.mxu0 0
    %371 = vmatpush2.bf16.msra.mxu0 0
    %372 = vmatprep.subr.bf16.mxu0 0
    %373 = vmatpush2.bf16.msra.mxu0 0
    %374 = vmatprep.subr.bf16.mxu0 0
    %375 = vmatpush2.bf16.msra.mxu0 0
    %376 = vmatprep.subr.bf16.mxu0 0
    %377 = vmatpush2.bf16.msra.mxu0 0
    %378 = vmatprep.subr.bf16.mxu0 0
    %379 = vmatpush2.bf16.msra.mxu0 0
    %380 = vmatprep.subr.bf16.mxu0 0
    %381 = vmatpush2.bf16.msra.mxu0 0
    %382 = vmatprep.subr.bf16.mxu0 0
    %383 = vmatpush2.bf16.msra.mxu0 0
    %384 = vmatprep.subr.bf16.mxu0 0
    %385 = vmatpush2.bf16.msra.mxu0 0
    %386 = vmatprep.mubr.bf16.mxu0 0
    %387 = vmatmul.mubr.bf16.gmra.mxu0 %v282
    %v388 = vpop.f32.mrf.mxu0
    %v389 = vadd.f32 %v304, %v388
    %v390 = vpop.f32.mrf.mxu0
    %v391 = vpop.f32.mrf.mxu0
    %v392 = vpop.f32.mrf.mxu0
    %393 = vdwg.mxu0
    %v394 = vtanh.pop %v389
    %v395 = vmul.f32 %v394, 2.0
    %vm396 = vcmask 64512
    %397 = vst.msk [vmem:[#allocation8] sm:$0xff] %vm396, %v395
    // Predicated region
    $region42: #{tpu_custom_call.1} parent=1 // pred_check
      _
    $region43: #{tpu_custom_call.1} parent=1 // pred_check_branch
      %399 = sbr.rel (0) target = $region45
    $region44: #{tpu_custom_call.1} parent=1 // pred_region
      %s401 = ssub.s32 128, 128
      %402 = vsyncadd [#allocation4], %s401
      %s404 = sshll.u32 [#allocation8], 4
      %s405 = int_to_ptr.vmem [resolvable:$true] %s404
      %407 = dma.vmem_to_hbm [thread:$0]  %s405, 128, %s7, [#allocation4]
    $region45: #{tpu_custom_call.1} parent=1 // pred_fallthru
      _
    // Predicated region
    $region46: #{tpu_custom_call.1} parent=1 // pred_check
      _
    $region47: #{tpu_custom_call.1} parent=1 // pred_check_branch
      %409 = sbr.rel (0) target = $region49
    $region48: #{tpu_custom_call.1} parent=1 // pred_region
      %410 = dma.done [#allocation4], 128
    $region49: #{tpu_custom_call.1} parent=1 // pred_fallthru
      _
    %411 = vsyncpa [#allocation3], 1
    %412 = vsyncpa [#allocation6], 1
    %413 = vsyncpa [#allocation4], 1

</llo_original>
